<compile_context>
chip_gen: v7x
topology: tpu7x:2x2x1
jax: 0.10.0
libtpu: 0.0.40
codegen_flags: <defaults>
</compile_context>

<pallas_src>
import math

import jax
import jax.numpy as jnp
from jax.experimental import pallas as pl
from jax.experimental.pallas import tpu as pltpu

LEAKY_SLOPE = 0.2
EPS = 1e-5
_RSQRT2 = 1.0 / math.sqrt(2.0)
_LANE = 128
_VMEM_LIMIT = 48 * 1024 * 1024   # headroom on v7x (64 MiB/TC); raise on v5e/v6e if needed


def _lane_pad(c):
    return ((c + _LANE - 1) // _LANE) * _LANE


# ----------------------- instance-norm statistics kernel ---------------------- #

def _stats_kernel(x_ref, o_ref):
    # x_ref: (Hp, Wp, C) one H/W-padded depth slab (zero halo adds 0 to the sums).
    # o_ref: (2, C) running [sum, sum of squares] per channel.
    @pl.when(pl.program_id(1) == 0)
    def _init():
        o_ref[...] = jnp.zeros_like(o_ref)

    x = x_ref[...].astype(jnp.float32)
    x2 = x.reshape(-1, x.shape[-1])                 # (Hp*Wp, C), lane dim unchanged
    o_ref[0:1, :] += jnp.sum(x2, axis=0, keepdims=True)
    o_ref[1:2, :] += jnp.sum(x2 * x2, axis=0, keepdims=True)


def _instance_stats(xp, count):
    """Per-(n, c) mean / rstd of the unpadded content of an H/W-padded tensor."""
    n, d, hp, wp, c = xp.shape
    sums = pl.pallas_call(
        _stats_kernel,
        out_shape=jax.ShapeDtypeStruct((n, 2, c), jnp.float32),
        grid=(n, d),
        in_specs=[pl.BlockSpec((None, None, hp, wp, c),
                               lambda i, j: (i, j, 0, 0, 0))],
        out_specs=pl.BlockSpec((None, 2, c), lambda i, j: (i, 0, 0)),
        compiler_params=pltpu.CompilerParams(
            dimension_semantics=("parallel", "arbitrary"),
            vmem_limit_bytes=_VMEM_LIMIT),
    )(xp)
    mean = sums[:, 0, :] / count
    var = jnp.maximum(sums[:, 1, :] / count - mean * mean, 0.0)
    rstd = jax.lax.rsqrt(var + EPS)
    return mean, rstd


# ----------------------------- fused conv3x3x3 kernel -------------------------- #

def _make_conv3d_kernel(H, W, Cin, Cout_p, cdt, *, fuse_pool, emit_stats,
                        shortcut, csc, xs_cpad):
    """shortcut: None (conv1) | 'identity' | 'learned' (conv2)."""
    Hp, Wp, HW = H + 2, W + 2, H * W
    H2, W2 = H // 2, W // 2
    HW4 = H2 * W2

    def pool2x2_sum(v, C):
        # 2x2 H/W SUM pool using only lane-preserving reshapes, leading-dim
        # slicing and VPU adds (no pool matrix, no MXU, no lane-dim reshape).
        v4 = v.reshape(H, W2, 2, C)
        vw = v4[:, :, 0, :] + v4[:, :, 1, :]         # (H, W2, C)
        v5 = vw.reshape(H2, 2, W2, C)
        vh = v5[:, 0, :, :] + v5[:, 1, :, :]         # (H2, W2, C)
        return vh.reshape(HW4, C)

    def kernel(*refs):
        it = iter(refs)
        x0_ref = next(it)          # depth slab d-1 (clamped), H/W-padded (Hp, Wp, Cin)
        x1_ref = next(it)          # depth slab d
        x2_ref = next(it)          # depth slab d+1 (clamped)
        a_ref = next(it)           # (1, Cin)  per-sample norm scale (or 1)
        b_ref = next(it)           # (1, Cin)  per-sample norm shift (or 0)
        w_ref = next(it)           # (27*Cin, Cout_p) conv weight, tap-major / Cin-minor
        bias_ref = next(it)        # (1, Cout_p)
        scin_ref = next(it) if shortcut is not None else None   # (HW, csc)
        wsc_ref = next(it) if shortcut == "learned" else None   # (csc, Cout_p)
        o_ref = next(it)
        xs_ref = next(it) if fuse_pool else None
        st_ref = next(it) if emit_stats else None
        tap_ref = next(it)         # VMEM scratch (HW, 27*Cin), dtype cdt

        d = pl.program_id(1)
        last_d = pl.num_programs(1) - 1

        # Static H/W interior mask (halo must stay zero after norm+leaky).
        row = jax.lax.broadcasted_iota(jnp.int32, (Hp, Wp), 0)
        col = jax.lax.broadcasted_iota(jnp.int32, (Hp, Wp), 1)
        interior = (row >= 1) & (row <= H) & (col >= 1) & (col <= W)

        aff_a = a_ref[...]
        aff_b = b_ref[...]

        def prologue(xr, depth_ok):
            x = xr[...].astype(jnp.float32)
            y = x * aff_a + aff_b                         # instance-norm apply (or id)
            y = jnp.where(y >= 0.0, y, LEAKY_SLOPE * y)   # LeakyReLU(0.2)
            keep = jnp.logical_and(interior, depth_ok)[:, :, None]
            return jnp.where(keep, y, 0.0)

        ys = (prologue(x0_ref, d > 0),          # depth halo handled via masks
              prologue(x1_ref, True),
              prologue(x2_ref, d < last_d))

        # In-VMEM im2col: assemble the (HW, 27*Cin) tap matrix, one big MXU matmul.
        t = 0
        for kd in range(3):
            yk = ys[kd]
            for kh in range(3):
                for kw in range(3):
                    tap = yk[kh:kh + H, kw:kw + W, :].reshape(HW, Cin)
                    tap_ref[:, t * Cin:(t + 1) * Cin] = tap.astype(tap_ref.dtype)
                    t += 1
        acc = jnp.dot(tap_ref[...], w_ref[...],
                      preferred_element_type=jnp.float32)           # (HW, Cout_p)
        acc = acc + bias_ref[...]

        if emit_stats:
            @pl.when(d == 0)
            def _init_stats():
                st_ref[...] = jnp.zeros_like(st_ref)

        if shortcut is not None:
            scin = scin_ref[...].astype(jnp.float32)                # (HW, csc)
            if shortcut == "learned":
                sc = jnp.dot(scin.astype(cdt), wsc_ref[...],
                             preferred_element_type=jnp.float32)    # (HW, Cout_p)
                res = (acc + sc) * _RSQRT2
                o_ref[...] = res.astype(o_ref.dtype)
            else:  # identity
                if csc == Cout_p:
                    res = (acc + scin) * _RSQRT2
                    o_ref[...] = res.astype(o_ref.dtype)
                else:
                    res = acc * _RSQRT2
                    o_ref[...] = res.astype(o_ref.dtype)
                    o_ref[:, :csc] = (res[:, :csc]
                                      + scin * _RSQRT2).astype(o_ref.dtype)
            return  # conv2 never pools / emits stats

        if fuse_pool:
            r = pool2x2_sum(acc, Cout_p) * 0.125                    # (HW4, Cout_p)
            xin = x1_ref[1:1 + H, 1:1 + W, :].astype(jnp.float32).reshape(HW, Cin)
            xs_val = pool2x2_sum(xin, Cin) * 0.125                  # (HW4, Cin)

            @pl.when(d % 2 == 0)
            def _first():
                o_ref[...] = r.astype(o_ref.dtype)
                if Cin == xs_cpad:
                    xs_ref[...] = xs_val.astype(xs_ref.dtype)
                else:
                    xs_ref[:, :Cin] = xs_val.astype(xs_ref.dtype)
                    xs_ref[:, Cin:] = jnp.zeros((HW4, xs_cpad - Cin), xs_ref.dtype)

            @pl.when(d % 2 == 1)
            def _second():
                total = o_ref[...] + r.astype(o_ref.dtype)
                o_ref[...] = total
                if Cin == xs_cpad:
                    xs_ref[...] = xs_ref[...] + xs_val.astype(xs_ref.dtype)
                else:
                    xs_ref[:, :Cin] = xs_ref[:, :Cin] + xs_val.astype(xs_ref.dtype)
                if emit_stats:
                    t32 = total.astype(jnp.float32)
                    st_ref[0:1, :] += jnp.sum(t32, axis=0, keepdims=True)
                    st_ref[1:2, :] += jnp.sum(t32 * t32, axis=0, keepdims=True)
        else:
            o_ref[...] = acc.astype(o_ref.dtype)
            if emit_stats:
                st_ref[0:1, :] += jnp.sum(acc, axis=0, keepdims=True)
                st_ref[1:2, :] += jnp.sum(acc * acc, axis=0, keepdims=True)

    return kernel


def _conv3d_call(xp, a, b, w_flat, bias, *, cdt, fuse_pool=False, emit_stats=False,
                 shortcut=None, scin=None, wsc=None):
    """Fused norm-apply + LeakyReLU + 3x3x3 conv (+pool/+stats | +shortcut&scale).

    xp: (N, D, H+2, W+2, Cin)  -- H/W halo only (depth halo handled in-kernel).
    Returns a tuple of outputs (main, [xs], [stats]).
    """
    n, d_, hp, wp, cin = xp.shape
    h_, w_ = hp - 2, wp - 2
    hw = h_ * w_
    cout_p = w_flat.shape[-1]
    xs_cpad = _lane_pad(cin)
    if fuse_pool:
        assert h_ % 2 == 0 and w_ % 2 == 0 and d_ % 2 == 0

    kernel = _make_conv3d_kernel(
        h_, w_, cin, cout_p, cdt, fuse_pool=fuse_pool, emit_stats=emit_stats,
        shortcut=shortcut, csc=(scin.shape[-1] if scin is not None else None),
        xs_cpad=xs_cpad)

    nd = d_
    slab = (None, None, hp, wp, cin)
    in_specs = [
        pl.BlockSpec(slab, lambda i, j: (i, jnp.maximum(j - 1, 0), 0, 0, 0)),
        pl.BlockSpec(slab, lambda i, j: (i, j, 0, 0, 0)),
        pl.BlockSpec(slab, lambda i, j: (i, jnp.minimum(j + 1, nd - 1), 0, 0, 0)),
        pl.BlockSpec((None, 1, cin), lambda i, j: (i, 0, 0)),
        pl.BlockSpec((None, 1, cin), lambda i, j: (i, 0, 0)),
        pl.BlockSpec(w_flat.shape, lambda i, j: (0, 0)),
        pl.BlockSpec((1, cout_p), lambda i, j: (0, 0)),
    ]
    args = [xp, xp, xp, a, b, w_flat, bias]

    if shortcut is not None:
        csc = scin.shape[-1]
        in_specs.append(pl.BlockSpec((None, None, hw, csc),
                                     lambda i, j: (i, j, 0, 0)))
        args.append(scin)
        if shortcut == "learned":
            in_specs.append(pl.BlockSpec(wsc.shape, lambda i, j: (0, 0)))
            args.append(wsc)

    out_shapes, out_specs = [], []
    if fuse_pool:
        h2, w2, d2 = h_ // 2, w_ // 2, d_ // 2
        hw4 = h2 * w2
        out_shapes.append(jax.ShapeDtypeStruct((n, d2, hw4, cout_p), jnp.float32))
        out_specs.append(pl.BlockSpec((None, None, hw4, cout_p),
                                      lambda i, j: (i, j // 2, 0, 0)))
        out_shapes.append(jax.ShapeDtypeStruct((n, d2, hw4, xs_cpad), jnp.float32))
        out_specs.append(pl.BlockSpec((None, None, hw4, xs_cpad),
                                      lambda i, j: (i, j // 2, 0, 0)))
    else:
        out_shapes.append(jax.ShapeDtypeStruct((n, d_, hw, cout_p), jnp.float32))
        out_specs.append(pl.BlockSpec((None, None, hw, cout_p),
                                      lambda i, j: (i, j, 0, 0)))
    if emit_stats:
        out_shapes.append(jax.ShapeDtypeStruct((n, 2, cout_p), jnp.float32))
        out_specs.append(pl.BlockSpec((None, 2, cout_p), lambda i, j: (i, 0, 0)))

    # Depth must be sequential when we revisit output blocks (pool pairs / stats).
    depth_sem = "arbitrary" if (fuse_pool or emit_stats) else "parallel"

    return pl.pallas_call(
        kernel,
        out_shape=tuple(out_shapes),
        grid=(n, d_),
        in_specs=in_specs,
        out_specs=tuple(out_specs),
        scratch_shapes=[pltpu.VMEM((hw, 27 * cin), cdt)],
        compiler_params=pltpu.CompilerParams(
            dimension_semantics=("parallel", depth_sem),
            vmem_limit_bytes=_VMEM_LIMIT),
    )(*args)


# --------------------------------- ResBlk module -------------------------------- #

class ResBlkPallas:
    def __init__(self, dim_in, dim_out, key, normalize=False, downsample=False,
                 compute_dtype=jnp.float32):
        # NOTE: on v6e/v7x prefer compute_dtype=jnp.bfloat16 (native MXU path,
        # half the weight bytes); prologue/accumulation stay f32 on all parts.
        self.dim_in, self.dim_out = dim_in, dim_out
        self.normalize, self.downsample = normalize, downsample
        self.learned_sc = dim_in != dim_out
        self.cdt = compute_dtype
        self.c1p = _lane_pad(dim_in)    # conv1 output / conv2 input channels (lane dense)
        self.c2p = _lane_pad(dim_out)   # conv2 output channels (lane dense)
        ks = jax.random.split(key, 9)

        def conv_w(k, co, ci, ksz):
            fan_in = ci * ksz ** 3
            return jax.random.normal(k, (co, ci, ksz, ksz, ksz), jnp.float32) / jnp.sqrt(
                jnp.float32(fan_in))

        # PyTorch-layout weights (OIDHW), deterministic synthetic init.
        self.w1 = conv_w(ks[0], dim_in, dim_in, 3)
        self.b1 = 0.1 * jax.random.normal(ks[1], (dim_in,), jnp.float32)
        self.w2 = conv_w(ks[2], dim_out, dim_in, 3)
        self.b2 = 0.1 * jax.random.normal(ks[3], (dim_out,), jnp.float32)
        if normalize:
            self.g1 = 1.0 + 0.1 * jax.random.normal(ks[4], (dim_in,), jnp.float32)
            self.be1 = 0.1 * jax.random.normal(ks[5], (dim_in,), jnp.float32)
            self.g2 = 1.0 + 0.1 * jax.random.normal(ks[6], (dim_in,), jnp.float32)
            self.be2 = 0.1 * jax.random.normal(ks[7], (dim_in,), jnp.float32)
            self.g2p = jnp.pad(self.g2, (0, self.c1p - dim_in))
            self.be2p = jnp.pad(self.be2, (0, self.c1p - dim_in))
        if self.learned_sc:
            self.wsc = conv_w(ks[8], dim_out, dim_in, 1)
            wsc_mat = self.wsc.reshape(dim_out, dim_in).T            # (Cin, Cout)
            self.wsc_pad = jnp.pad(
                wsc_mat, ((0, self.c1p - dim_in), (0, self.c2p - dim_out))
            ).astype(compute_dtype)

        # Matmul-layout conv weights: K axis is tap-major (t = kd*9+kh*3+kw),
        # Cin-minor; Cout padded to a lane-dense multiple of 128 (zero columns).
        w1_t = jnp.transpose(self.w1, (2, 3, 4, 1, 0))               # (3,3,3,Cin,Cout)
        self.w1_mat = jnp.pad(w1_t.reshape(27 * dim_in, dim_in),
                              ((0, 0), (0, self.c1p - dim_in))).astype(compute_dtype)
        self.b1_2d = jnp.pad(self.b1, (0, self.c1p - dim_in)).reshape(1, self.c1p)

        w2_t = jnp.transpose(self.w2, (2, 3, 4, 1, 0))               # (3,3,3,Cin,Cout)
        w2_t = jnp.pad(w2_t, ((0, 0), (0, 0), (0, 0),
                              (0, self.c1p - dim_in), (0, self.c2p - dim_out)))
        self.w2_mat = w2_t.reshape(27 * self.c1p, self.c2p).astype(compute_dtype)
        self.b2_2d = jnp.pad(self.b2, (0, self.c2p - dim_out)).reshape(1, self.c2p)

    # per-sample affine (norm apply) for conv1 (unpadded Cin) / conv2 (padded c1p)
    def _affine1(self, n, mean=None, rstd=None):
        c = self.dim_in
        if mean is None:
            return jnp.ones((n, 1, c), jnp.float32), jnp.zeros((n, 1, c), jnp.float32)
        a = rstd * self.g1[None, :]
        b = self.be1[None, :] - mean * a
        return a.reshape(n, 1, c), b.reshape(n, 1, c)

    def _affine2(self, n, mean=None, rstd=None):
        c = self.c1p
        if mean is None:
            return jnp.ones((n, 1, c), jnp.float32), jnp.zeros((n, 1, c), jnp.float32)
        a = rstd * self.g2p[None, :]       # padded channels: g=0 -> a=0, b=0
        b = self.be2p[None, :] - mean * a
        return a.reshape(n, 1, c), b.reshape(n, 1, c)

    # ---- Pallas forward (semantics of ResBlk.forward) ----
    def __call__(self, x_ncdhw):
        x = jnp.transpose(x_ncdhw, (0, 2, 3, 4, 1)).astype(jnp.float32)  # (N,D,H,W,C)
        n, d, h, w, c = x.shape
        # H/W halo only; depth halos handled in-kernel (clamped slabs + masks).
        # TODO(synk): build the H/W halo inside the kernel to remove this pad pass.
        xp = jnp.pad(x, ((0, 0), (0, 0), (1, 1), (1, 1), (0, 0)))

        if self.normalize:
            mean1, rstd1 = _instance_stats(xp, d * h * w)
            a1, b1 = self._affine1(n, mean1, rstd1)
        else:
            a1, b1 = self._affine1(n)

        emit_stats = self.normalize
        # conv1: norm1-apply + leaky + 3x3x3 conv (+ fused 2x2x2 pool; also emits the
        # pooled raw x for the shortcut and the fused norm2 sum/sumsq statistics).
        if self.downsample:
            outs = _conv3d_call(xp, a1, b1, self.w1_mat, self.b1_2d, cdt=self.cdt,
                                fuse_pool=True, emit_stats=emit_stats)
            r1, xs = outs[0], outs[1]
            st2 = outs[2] if emit_stats else None
            d2, h2, w2 = d // 2, h // 2, w // 2
        else:
            outs = _conv3d_call(xp, a1, b1, self.w1_mat, self.b1_2d, cdt=self.cdt,
                                fuse_pool=False, emit_stats=emit_stats)
            r1 = outs[0]
            st2 = outs[1] if emit_stats else None
            xs = x.reshape(n, d, h * w, c)
            d2, h2, w2 = d, h, w

        # conv2 input: r1 (n, d2, h2*w2, c1p) -> re-apply the H/W halo.
        r1p = jnp.pad(r1.reshape(n, d2, h2, w2, self.c1p),
                      ((0, 0), (0, 0), (1, 1), (1, 1), (0, 0)))

        if self.normalize:
            cnt2 = float(d2 * h2 * w2)
            mean2 = st2[:, 0, :] / cnt2
            var2 = jnp.maximum(st2[:, 1, :] / cnt2 - mean2 * mean2, 0.0)
            rstd2 = jax.lax.rsqrt(var2 + EPS)
            a2, b2 = self._affine2(n, mean2, rstd2)
        else:
            a2, b2 = self._affine2(n)

        wsc = None
        if self.learned_sc:
            wsc = (self.wsc_pad if xs.shape[-1] == self.c1p
                   else self.wsc_pad[:self.dim_in, :])
        # conv2: norm2-apply + leaky + 3x3x3 conv + (1x1x1 shortcut) + add + /sqrt(2)
        outs2 = _conv3d_call(
            r1p, a2, b2, self.w2_mat, self.b2_2d, cdt=self.cdt,
            fuse_pool=False, emit_stats=False,
            shortcut="learned" if self.learned_sc else "identity",
            scin=xs, wsc=wsc)

        out = outs2[0][..., :self.dim_out].reshape(n, d2, h2, w2, self.dim_out)
        return jnp.transpose(out, (0, 4, 1, 2, 3))  # back to NCDHW

    # ---- pure-JAX reference mirroring the PyTorch module (for verification) ----
    def reference(self, x):
        prec = jax.lax.Precision.HIGHEST

        def conv(x, w, b=None, pad=1):
            out = jax.lax.conv_general_dilated(
                x, w, window_strides=(1, 1, 1), padding=((pad, pad),) * 3,
                dimension_numbers=("NCDHW", "OIDHW", "NCDHW"), precision=prec)
            if b is not None:
                out = out + b.reshape(1, -1, 1, 1, 1)
            return out

        def inorm(x, g, b):
            mu = jnp.mean(x, axis=(2, 3, 4), keepdims=True)
            var = jnp.mean((x - mu) ** 2, axis=(2, 3, 4), keepdims=True)
            return (x - mu) / jnp.sqrt(var + EPS) * g.reshape(1, -1, 1, 1, 1) \
                + b.reshape(1, -1, 1, 1, 1)

        def lrelu(x):
            return jnp.where(x >= 0, x, LEAKY_SLOPE * x)

        def pool(x):
            n, c, d, h, w = x.shape
            return x.reshape(n, c, d // 2, 2, h // 2, 2, w // 2, 2).mean(axis=(3, 5, 7))

        sc = x
        if self.learned_sc:
            sc = conv(sc, self.wsc.astype(jnp.float32), None, pad=0)
        if self.downsample:
            sc = pool(sc)
        r = x
        if self.normalize:
            r = inorm(r, self.g1, self.be1)
        r = lrelu(r)
        r = conv(r, self.w1, self.b1)
        if self.downsample:
            r = pool(r)
        if self.normalize:
            r = inorm(r, self.g2, self.be2)
        r = lrelu(r)
        r = conv(r, self.w2, self.b2)
        return (sc + r) / math.sqrt(2.0)


# ------------------------------------ main ----------------------------------- #

if __name__ == "__main__":
    key = jax.random.PRNGKey(0)
    kx, kp1, kp2, kp3 = jax.random.split(key, 4)

    N, Cin, Cout, D, H, W = 2, 4, 8, 8, 8, 8
    x = jax.random.normal(kx, (N, Cin, D, H, W), jnp.float32)

    # Config 1: learned shortcut + instance norm + downsample (f32 MXU inputs).
    blk = ResBlkPallas(Cin, Cout, kp1, normalize=True, downsample=True)
    y = jax.block_until_ready(blk(x))
    y_ref = jax.block_until_ready(blk.reference(x))
    assert y.shape == (N, Cout, D // 2, H // 2, W // 2), y.shape
    err = float(jnp.max(jnp.abs(y - y_ref)))
    assert err < 2e-3, f"config1 max abs err {err}"

    # Config 2: identity shortcut, defaults (no norm, no downsample), f32.
    blk2 = ResBlkPallas(Cin, Cin, kp2, normalize=False, downsample=False)
    y2 = jax.block_until_ready(blk2(x))
    y2_ref = jax.block_until_ready(blk2.reference(x))
    assert y2.shape == (N, Cin, D, H, W), y2.shape
    err2 = float(jnp.max(jnp.abs(y2 - y2_ref)))
    assert err2 < 2e-3, f"config2 max abs err {err2}"

    # Config 3: bf16 MXU inputs (f32 accumulation), downsample + learned shortcut.
    blk3 = ResBlkPallas(Cin, Cout, kp3, normalize=False, downsample=True,
                        compute_dtype=jnp.bfloat16)
    y3 = jax.block_until_ready(blk3(x))
    y3_ref = jax.block_until_ready(blk3.reference(x))
    assert y3.shape == (N, Cout, D // 2, H // 2, W // 2), y3.shape
    err3 = float(jnp.max(jnp.abs(y3 - y3_ref)))
    assert err3 < 1e-1, f"config3 (bf16) max abs err {err3}"

    print("KERNEL_OK")
</pallas_src>

<mosaic_0001>
module attributes {stable_mosaic.version = 11 : i64} {
  func.func @_stats_kernel(%arg0: i32, %arg1: i32, %arg2: memref<1x1x10x10x4xf32, #tpu.memory_space<vmem>>, %arg3: memref<1x2x4xf32, #tpu.memory_space<vmem>>) attributes {dimension_semantics = [#tpu.dimension_semantics<parallel>, #tpu.dimension_semantics<arbitrary>], iteration_bounds = array<i64: 2, 8>, scalar_prefetch = 0 : i64, scratch_operands = 0 : i64, tpu.core_type = #tpu.core_type<tc>, window_params = [{transform_indices = @transform_0, window_bounds = array<i64: 1, 1, 10, 10, 4>}, {transform_indices = @transform_1, window_bounds = array<i64: 1, 2, 4>}]} {
    %c0_i32 = arith.constant 0 : i32
    %0 = arith.cmpi eq, %arg1, %c0_i32 : i32
    %1 = arith.extui %0 : i1 to i32
    %c0_i32_0 = arith.constant 0 : i32
    %2 = arith.cmpi ne, %1, %c0_i32_0 : i32
    scf.if %2 {
      %cst_17 = arith.constant 0.000000e+00 : f32
      %23 = vector.broadcast %cst_17 : f32 to vector<2x4xf32>
      %c0_18 = arith.constant 0 : index
      %c0_19 = arith.constant 0 : index
      %c0_20 = arith.constant 0 : index
      %24 = vector.load %arg3[%c0_18, %c0_19, %c0_20] : memref<1x2x4xf32, #tpu.memory_space<vmem>>, vector<1x2x4xf32>
      %25 = vector.shape_cast %24 : vector<1x2x4xf32> to vector<2x4xf32>
      %26 = vector.shape_cast %23 : vector<2x4xf32> to vector<1x2x4xf32>
      tpu.vector_store %arg3[%c0_18, %c0_19, %c0_20], %26 {strides = array<i32>} : memref<1x2x4xf32, #tpu.memory_space<vmem>>, vector<1x2x4xf32>,
    } else {
    }
    %c0 = arith.constant 0 : index
    %c0_1 = arith.constant 0 : index
    %c0_2 = arith.constant 0 : index
    %c0_3 = arith.constant 0 : index
    %c0_4 = arith.constant 0 : index
    %3 = vector.load %arg2[%c0, %c0_1, %c0_2, %c0_3, %c0_4] : memref<1x1x10x10x4xf32, #tpu.memory_space<vmem>>, vector<1x1x10x10x4xf32>
    %4 = vector.shape_cast %3 : vector<1x1x10x10x4xf32> to vector<10x10x4xf32>
    %5 = vector.shape_cast %4 : vector<10x10x4xf32> to vector<100x4xf32>
    %c0_5 = arith.constant 0 : index
    %c0_6 = arith.constant 0 : index
    %c0_7 = arith.constant 0 : index
    %6 = vector.load %arg3[%c0_5, %c0_6, %c0_7] : memref<1x2x4xf32, #tpu.memory_space<vmem>>, vector<1x1x4xf32>
    %7 = vector.shape_cast %6 : vector<1x1x4xf32> to vector<1x4xf32>
    %cst = arith.constant dense<0.000000e+00> : vector<4xf32>
    %8 = vector.multi_reduction <add>, %5, %cst [0] : vector<100x4xf32> to vector<4xf32>
    %9 = vector.shape_cast %8 : vector<4xf32> to vector<1x4xf32>
    %10 = arith.addf %7, %9 : vector<1x4xf32>
    %c0_8 = arith.constant 0 : index
    %c0_9 = arith.constant 0 : index
    %c0_10 = arith.constant 0 : index
    %11 = vector.load %arg3[%c0_8, %c0_9, %c0_10] : memref<1x2x4xf32, #tpu.memory_space<vmem>>, vector<1x1x4xf32>
    %12 = vector.shape_cast %11 : vector<1x1x4xf32> to vector<1x4xf32>
    %13 = vector.shape_cast %10 : vector<1x4xf32> to vector<1x1x4xf32>
    tpu.vector_store %arg3[%c0_8, %c0_9, %c0_10], %13 {strides = array<i32>} : memref<1x2x4xf32, #tpu.memory_space<vmem>>, vector<1x1x4xf32>,
    %c0_11 = arith.constant 0 : index
    %c1 = arith.constant 1 : index
    %c0_12 = arith.constant 0 : index
    %14 = vector.load %arg3[%c0_11, %c1, %c0_12] : memref<1x2x4xf32, #tpu.memory_space<vmem>>, vector<1x1x4xf32>
    %15 = vector.shape_cast %14 : vector<1x1x4xf32> to vector<1x4xf32>
    %16 = arith.mulf %5, %5 : vector<100x4xf32>
    %cst_13 = arith.constant dense<0.000000e+00> : vector<4xf32>
    %17 = vector.multi_reduction <add>, %16, %cst_13 [0] : vector<100x4xf32> to vector<4xf32>
    %18 = vector.shape_cast %17 : vector<4xf32> to vector<1x4xf32>
    %19 = arith.addf %15, %18 : vector<1x4xf32>
    %c0_14 = arith.constant 0 : index
    %c1_15 = arith.constant 1 : index
    %c0_16 = arith.constant 0 : index
    %20 = vector.load %arg3[%c0_14, %c1_15, %c0_16] : memref<1x2x4xf32, #tpu.memory_space<vmem>>, vector<1x1x4xf32>
    %21 = vector.shape_cast %20 : vector<1x1x4xf32> to vector<1x4xf32>
    %22 = vector.shape_cast %19 : vector<1x4xf32> to vector<1x1x4xf32>
    tpu.vector_store %arg3[%c0_14, %c1_15, %c0_16], %22 {strides = array<i32>} : memref<1x2x4xf32, #tpu.memory_space<vmem>>, vector<1x1x4xf32>,
    return
  }
  func.func @transform_0(%arg0: i32, %arg1: i32) -> (i32, i32, i32, i32, i32) {
    %c0_i32 = arith.constant 0 : i32
    %c0_i32_0 = arith.constant 0 : i32
    %c0_i32_1 = arith.constant 0 : i32
    %c0_i32_2 = arith.constant 0 : i32
    return %arg0, %arg1, %c0_i32, %c0_i32_0, %c0_i32_1 : i32, i32, i32, i32, i32
  }
  func.func @transform_1(%arg0: i32, %arg1: i32) -> (i32, i32, i32) {
    %c0_i32 = arith.constant 0 : i32
    %c0_i32_0 = arith.constant 0 : i32
    %c0_i32_1 = arith.constant 0 : i32
    return %arg0, %c0_i32, %c0_i32_0 : i32, i32, i32
  }
}

</mosaic_0001>

<llo_original>
// kernel: tpu_custom_call.1
$region0: #{tpu_custom_call.1}
  #allocation0 [shape = 'u32[]', space=smem, size = 0x4, offset = 0x4, fixed_abs, tag = 'smem constant byte address 0x4 - core index']
  #allocation1 [shape = 'u32[144,128]{1,0:T(1,128)}', space=vmem, size = 0x12000, scoped, tag = 'internal scratch']
  %s0 = inlined_call_operand.vmem [shape: f32[2,8,10,10,4], index: 0, kind: input, shape index: {}]
  %s1 = inlined_call_operand.hbm [shape: f32[2,2,4], index: 1, kind: output, shape index: {}]
  %s2 = sld [smem:[#allocation0]]
  $region41: #{tpu_custom_call.1} parent=0
    _
  %s4 = ssub.s32 1, %s2
  %s5 = scalar_select 0, %s4, %s2
  $region1: #{tpu_custom_call.1} parent=0
    #allocation2 [shape = 'u8[2048]{0}', space=vmem, size = 0x800, scoped, tag = 'output window, operand 0']
    #allocation3 [shape = 's32[2]{0}', space=sflag, size = 0x8, scoped, tag = 'scoped memory for tpu_custom_call.1']
    %6 = vsyncpa [#allocation3], 0
    %s7 = scalar_lea.sflag [#allocation3], 1
    %8 = vsyncpa %s7, 0
    loop: start=0, step=1, limit=18
    $region2: #{tpu_custom_call.1} parent=1 // loop_pre_header
      _
    $region3: #{tpu_custom_call.1} parent=1 // loop_header
      %s10 = sphi 0, %s14
      %p11 = scmp.ge.s32.totalorder %s10, 18
      %s17 = sphi 0, %s29
      %s18 = sphi 0, %s25
      %s19 = sphi 0, %s17
      %s20 = sphi 0, %s18
      %s21 = sphi 0, %s19
      %s22 = sphi 0, %s20
      %s34 = sphi 0, %s36
      %s37 = sphi 0, %s34
      %s38 = sphi 0, %s37
      %s54 = sphi 0, %s38
      %s60 = sphi 0, %s62
      %s63 = sphi 0, %s60
      %s64 = sphi 0, %s63
      %s80 = sphi 0, %s64
    $region4: #{tpu_custom_call.1} parent=1 // loop_header_branch
      %13 = sbr.rel (%p11) target = $region8
    $region5: #{tpu_custom_call.1} parent=1 // loop_body
      %s15 = ssub.s32 %s10, 1
      %s16 = ssub.s32 %s10, 2
      %s23 = sadd.s32 1, %s18
      %p24 = scmp.ge.s32.totalorder %s23, 8
      %s25 = scalar_select %p24, 0, %s23
      %s26 = sadd.s32 1, %s17
      %s27 = scalar_select %p24, %s26, %s17
      %p28 = scmp.ge.s32.totalorder %s27, 2
      %s29 = scalar_select %p28, 0, %s27
      %s30 = ssub.s32 %s17, %s29
      %s31 = ssub.s32 %s18, %s25
      %s32 = sor.u32 %s30, %s31
      %p33 = scmp.eq.s32.totalorder %s32, 0
      %s35 = sadd.s32 %s34, 1
      %s36 = scalar_select %p33, %s34, %s35
      %p39 = pneg %p33
      %p40 = scmp.eq.s32.totalorder %s10, 15
      %p41 = por %p39, %p40
      %p42 = scmp.ne.s32.totalorder %s34, %s37
      %p43 = scmp.eq.s32.totalorder %s10, 0
      %p44 = por %p42, %p43
      %p45 = scmp.ne.s32.totalorder %s34, %s37
      %p46 = scmp.eq.s32.totalorder %s15, 15
      %p47 = por %p45, %p46
      %p48 = scmp.ne.s32.totalorder %s37, %s38
      %p49 = scmp.eq.s32.totalorder %s15, 0
      %p50 = por %p48, %p49
      %p51 = scmp.ne.s32.totalorder %s37, %s38
      %p52 = scmp.eq.s32.totalorder %s16, 15
      %p53 = por %p51, %p52
      %p55 = scmp.ne.s32.totalorder %s38, %s54
      %p56 = scmp.eq.s32.totalorder %s16, 0
      %p57 = por %p55, %p56
      %s58 = ssub.s32 %s17, %s29
      %p59 = scmp.eq.s32.totalorder %s58, 0
      %s61 = sadd.s32 %s60, 1
      %s62 = scalar_select %p59, %s60, %s61
      %p65 = pneg %p59
      %p66 = scmp.eq.s32.totalorder %s10, 15
      %p67 = por %p65, %p66
      %p68 = scmp.ne.s32.totalorder %s60, %s63
      %p69 = scmp.eq.s32.totalorder %s10, 0
      %p70 = por %p68, %p69
      %p71 = scmp.ne.s32.totalorder %s60, %s63
      %p72 = scmp.eq.s32.totalorder %s15, 15
      %p73 = por %p71, %p72
      %p74 = scmp.ne.s32.totalorder %s63, %s64
      %p75 = scmp.eq.s32.totalorder %s15, 0
      %p76 = por %p74, %p75
      %p77 = scmp.ne.s32.totalorder %s63, %s64
      %p78 = scmp.eq.s32.totalorder %s16, 15
      %p79 = por %p77, %p78
      %p81 = scmp.ne.s32.totalorder %s64, %s80
      %p82 = scmp.eq.s32.totalorder %s16, 0
      %p83 = por %p81, %p82
      %p84 = scmp.le.s32.totalorder 1, %s10
      %p85 = scmp.lt.s32.totalorder %s10, 17
      %p86 = pnand %p84, %p85
      %p87 = pneg %p86
      // Predicated region
      $region9: #{tpu_custom_call.1} parent=5 // pred_check
        _
      $region10: #{tpu_custom_call.1} parent=5 // pred_check_branch
        %89 = sbr.rel (%p86) target = $region12
      $region11: #{tpu_custom_call.1} parent=5 // pred_region
        %s90 = ssub.s32 %s10, 1
      $region12: #{tpu_custom_call.1} parent=5 // pred_fallthru
        _
      %p91 = scmp.lt.s32.totalorder %s10, 16
      // Predicated region
      $region13: #{tpu_custom_call.1} parent=5 // pred_check
        %p92 = pneg %p91
      $region14: #{tpu_custom_call.1} parent=5 // pred_check_branch
        %94 = sbr.rel (%p92) target = $region16
      $region15: #{tpu_custom_call.1} parent=5 // pred_region
        // Predicated region
        $region17: #{tpu_custom_call.1} parent=15 // pred_check
          %p95 = pneg %p44
        $region18: #{tpu_custom_call.1} parent=15 // pred_check_branch
          %97 = sbr.rel (%p95) target = $region20
        $region19: #{tpu_custom_call.1} parent=15 // pred_region
          %p98 = scmp.lt.s32.totalorder %s17, 1
          %s99 = scalar_select %p98, %s17, 1
          %p100 = scmp.lt.s32.totalorder %s18, 7
          %s101 = scalar_select %p100, %s18, 7
          %s102 = smul.addr %s101, 20
          %s103 = smul.addr %s99, 160
          %s104 = sadd.s32 %s102, %s103
          %s105 = smul.addr %s104, 8
          %s106 = scalar_lea.vmem %s0, %s105
        $region20: #{tpu_custom_call.1} parent=15 // pred_fallthru
          _
      $region16: #{tpu_custom_call.1} parent=5 // pred_fallthru
        _
      %p107 = scmp.le.s32.totalorder 1, %s10
      %p108 = scmp.lt.s32.totalorder %s10, 17
      %p109 = pnand %p107, %p108
      %p110 = pneg %p109
      // Predicated region
      $region21: #{tpu_custom_call.1} parent=5 // pred_check
        _
      $region22: #{tpu_custom_call.1} parent=5 // pred_check_branch
        %112 = sbr.rel (%p109) target = $region24
      $region23: #{tpu_custom_call.1} parent=5 // pred_region
        %s113 = ssub.s32 %s10, 1
        %p114 = scmp.lt.s32.totalorder %s19, 1
        %s115 = scalar_select %p114, %s19, 1
        %p116 = scmp.lt.s32.totalorder %s20, 7
        %s117 = scalar_select %p116, %s20, 7
        %s118 = smul.addr %s117, 20
        %s119 = smul.addr %s115, 160
        %s120 = sadd.s32 %s118, %s119
        %s121 = smul.addr %s120, 8
        %s122 = scalar_lea.vmem %s0, %s121
        %p123 = pneg %p50
        %p124 = pneg %p47
        %p125 = pneg %p76
        %p126 = pneg %p73
        %s127 = sand.u32 %s63, 1
        %s128 = scalar_lea.sflag [#allocation3], %s127
        %s129 = sand.u32 %s63, 1
        %s130 = smul.addr %s129, 2
        %s131 = scalar_lea.vmem [#allocation2], %s130
        %p132 = scmp.lt.s32.totalorder %s19, 1
        %s133 = scalar_select %p132, %s19, 1
        %p134 = scmp.lt.s32.totalorder %s20, 7
        %s135 = scalar_select %p134, %s20, 7
        %s136 = smul.addr %s135, 20
        %s137 = smul.addr %s133, 160
        %s138 = sadd.s32 %s136, %s137
        %s139 = smul.addr %s138, 8
        %s140 = scalar_lea.vmem %s0, %s139
        %p141 = scmp.eq.s32.totalorder %s20, 0
        // Predicated region
        $region25: #{tpu_custom_call.1} parent=23 // pred_check
          %p142 = pneg %p141
        $region26: #{tpu_custom_call.1} parent=23 // pred_check_branch
          %144 = sbr.rel (%p142) target = $region28
        $region27: #{tpu_custom_call.1} parent=23 // pred_region
          %vm145 = vcmask 25600
          %146 = vst.msk [vmem:[%s131] sm:$0x3] %vm145, 0.0
        $region28: #{tpu_custom_call.1} parent=23 // pred_fallthru
          _
        %v147 = vld [vmem:[%s140] sm:$0xff]
        %v148 = vld [vmem:[%s140 + $0x8] sm:$0x3]
        %v149 = vld [vmem:[%s140 + $0x10] sm:$0xff]
        %v150 = vld [vmem:[%s140 + $0x18] sm:$0x3]
        %v151 = vld [vmem:[%s140 + $0x20] sm:$0xff]
        %v152 = vld [vmem:[%s140 + $0x28] sm:$0x3]
        %v153 = vld [vmem:[%s140 + $0x30] sm:$0xff]
        %v154 = vld [vmem:[%s140 + $0x38] sm:$0x3]
        %v155 = vld [vmem:[%s140 + $0x40] sm:$0xff]
        %v156 = vld [vmem:[%s140 + $0x48] sm:$0x3]
        %v157 = vld [vmem:[%s140 + $0x50] sm:$0xff]
        %v158 = vld [vmem:[%s140 + $0x58] sm:$0x3]
        %v159 = vld [vmem:[%s140 + $0x60] sm:$0xff]
        %v160 = vld [vmem:[%s140 + $0x68] sm:$0x3]
        %v161 = vld [vmem:[%s140 + $0x70] sm:$0xff]
        %v162 = vld [vmem:[%s140 + $0x78] sm:$0x3]
        %v163 = vld [vmem:[%s140 + $0x80] sm:$0xff]
        %v164 = vld [vmem:[%s140 + $0x88] sm:$0x3]
        %v165 = vld [vmem:[%s140 + $0x90] sm:$0xff]
        %v166 = vld [vmem:[%s140 + $0x98] sm:$0x3]
        %v187 = vcombine.high %v147, %v147
        %v189 = vunpack.c.l.s4 1983009808
        %v190 = vunpack.c.0.s8 %v189
        %v191 = vlaneseq
        %v192 = vshrl.u32 %v191, 7
        %v193 = vsub.s32 %v190, %v192
        %v194 = vrot.slane %v147, %v193
        %v196 = vunpack.c.l.s4 1983009808
        %v197 = vunpack.c.0.s8 %v196
        %v198 = vlaneseq
        %v199 = vshrl.u32 %v198, 7
        %v200 = vsub.s32 %v197, %v199
        %v201 = vrot.slane %v187, %v200
        %v202 = vcombine.high %v194, %v194
        %v203 = vcombine.high %v201, %v201
        %v205 = vunpack.c.l.s4 1983009808
        %v206 = vunpack.c.0.s8 %v205
        %v207 = vlaneseq
        %v208 = vshrl.u32 %v207, 7
        %v209 = vsub.s32 %v206, %v208
        %v210 = vrot.slane %v148, %v209
        %v211 = vcombine.high %v149, %v149
        %v213 = vunpack.c.l.s4 1983009808
        %v214 = vunpack.c.0.s8 %v213
        %v215 = vlaneseq
        %v216 = vshrl.u32 %v215, 7
        %v217 = vsub.s32 %v214, %v216
        %v218 = vrot.slane %v149, %v217
        %v220 = vunpack.c.l.s4 1983009808
        %v221 = vunpack.c.0.s8 %v220
        %v222 = vlaneseq
        %v223 = vshrl.u32 %v222, 7
        %v224 = vsub.s32 %v221, %v223
        %v225 = vrot.slane %v211, %v224
        %v226 = vcombine.high %v218, %v218
        %v227 = vcombine.high %v225, %v225
        %v229 = vunpack.c.l.s4 1983009808
        %v230 = vunpack.c.0.s8 %v229
        %v231 = vlaneseq
        %v232 = vshrl.u32 %v231, 7
        %v233 = vsub.s32 %v230, %v232
        %v234 = vrot.slane %v150, %v233
        %v235 = vcombine.high %v151, %v151
        %v237 = vunpack.c.l.s4 1983009808
        %v238 = vunpack.c.0.s8 %v237
        %v239 = vlaneseq
        %v240 = vshrl.u32 %v239, 7
        %v241 = vsub.s32 %v238, %v240
        %v242 = vrot.slane %v151, %v241
        %v244 = vunpack.c.l.s4 1983009808
        %v245 = vunpack.c.0.s8 %v244
        %v246 = vlaneseq
        %v247 = vshrl.u32 %v246, 7
        %v248 = vsub.s32 %v245, %v247
        %v249 = vrot.slane %v235, %v248
        %v250 = vcombine.high %v242, %v242
        %v251 = vcombine.high %v249, %v249
        %v253 = vunpack.c.l.s4 1983009808
        %v254 = vunpack.c.0.s8 %v253
        %v255 = vlaneseq
        %v256 = vshrl.u32 %v255, 7
        %v257 = vsub.s32 %v254, %v256
        %v258 = vrot.slane %v152, %v257
        %v259 = vcombine.high %v153, %v153
        %v261 = vunpack.c.l.s4 1983009808
        %v262 = vunpack.c.0.s8 %v261
        %v263 = vlaneseq
        %v264 = vshrl.u32 %v263, 7
        %v265 = vsub.s32 %v262, %v264
        %v266 = vrot.slane %v153, %v265
        %v268 = vunpack.c.l.s4 1983009808
        %v269 = vunpack.c.0.s8 %v268
        %v270 = vlaneseq
        %v271 = vshrl.u32 %v270, 7
        %v272 = vsub.s32 %v269, %v271
        %v273 = vrot.slane %v259, %v272
        %v274 = vcombine.high %v266, %v266
        %v275 = vcombine.high %v273, %v273
        %v277 = vunpack.c.l.s4 1983009808
        %v278 = vunpack.c.0.s8 %v277
        %v279 = vlaneseq
        %v280 = vshrl.u32 %v279, 7
        %v281 = vsub.s32 %v278, %v280
        %v282 = vrot.slane %v154, %v281
        %v283 = vcombine.high %v155, %v155
        %v285 = vunpack.c.l.s4 1983009808
        %v286 = vunpack.c.0.s8 %v285
        %v287 = vlaneseq
        %v288 = vshrl.u32 %v287, 7
        %v289 = vsub.s32 %v286, %v288
        %v290 = vrot.slane %v155, %v289
        %v292 = vunpack.c.l.s4 1983009808
        %v293 = vunpack.c.0.s8 %v292
        %v294 = vlaneseq
        %v295 = vshrl.u32 %v294, 7
        %v296 = vsub.s32 %v293, %v295
        %v297 = vrot.slane %v283, %v296
        %v298 = vcombine.high %v290, %v290
        %v299 = vcombine.high %v297, %v297
        %v301 = vunpack.c.l.s4 1983009808
        %v302 = vunpack.c.0.s8 %v301
        %v303 = vlaneseq
        %v304 = vshrl.u32 %v303, 7
        %v305 = vsub.s32 %v302, %v304
        %v306 = vrot.slane %v156, %v305
        %v307 = vcombine.high %v157, %v157
        %v309 = vunpack.c.l.s4 1983009808
        %v310 = vunpack.c.0.s8 %v309
        %v311 = vlaneseq
        %v312 = vshrl.u32 %v311, 7
        %v313 = vsub.s32 %v310, %v312
        %v314 = vrot.slane %v157, %v313
        %v316 = vunpack.c.l.s4 1983009808
        %v317 = vunpack.c.0.s8 %v316
        %v318 = vlaneseq
        %v319 = vshrl.u32 %v318, 7
        %v320 = vsub.s32 %v317, %v319
        %v321 = vrot.slane %v307, %v320
        %v322 = vcombine.high %v314, %v314
        %v323 = vcombine.high %v321, %v321
        %v325 = vunpack.c.l.s4 1983009808
        %v326 = vunpack.c.0.s8 %v325
        %v327 = vlaneseq
        %v328 = vshrl.u32 %v327, 7
        %v329 = vsub.s32 %v326, %v328
        %v330 = vrot.slane %v158, %v329
        %v331 = vcombine.high %v159, %v159
        %v333 = vunpack.c.l.s4 1983009808
        %v334 = vunpack.c.0.s8 %v333
        %v335 = vlaneseq
        %v336 = vshrl.u32 %v335, 7
        %v337 = vsub.s32 %v334, %v336
        %v338 = vrot.slane %v159, %v337
        %v340 = vunpack.c.l.s4 1983009808
        %v341 = vunpack.c.0.s8 %v340
        %v342 = vlaneseq
        %v343 = vshrl.u32 %v342, 7
        %v344 = vsub.s32 %v341, %v343
        %v345 = vrot.slane %v331, %v344
        %v346 = vcombine.high %v338, %v338
        %v347 = vcombine.high %v345, %v345
        %v349 = vunpack.c.l.s4 1983009808
        %v350 = vunpack.c.0.s8 %v349
        %v351 = vlaneseq
        %v352 = vshrl.u32 %v351, 7
        %v353 = vsub.s32 %v350, %v352
        %v354 = vrot.slane %v160, %v353
        %v355 = vcombine.high %v161, %v161
        %v357 = vunpack.c.l.s4 1983009808
        %v358 = vunpack.c.0.s8 %v357
        %v359 = vlaneseq
        %v360 = vshrl.u32 %v359, 7
        %v361 = vsub.s32 %v358, %v360
        %v362 = vrot.slane %v161, %v361
        %v364 = vunpack.c.l.s4 1983009808
        %v365 = vunpack.c.0.s8 %v364
        %v366 = vlaneseq
        %v367 = vshrl.u32 %v366, 7
        %v368 = vsub.s32 %v365, %v367
        %v369 = vrot.slane %v355, %v368
        %v370 = vcombine.high %v362, %v362
        %v371 = vcombine.high %v369, %v369
        %v373 = vunpack.c.l.s4 1983009808
        %v374 = vunpack.c.0.s8 %v373
        %v375 = vlaneseq
        %v376 = vshrl.u32 %v375, 7
        %v377 = vsub.s32 %v374, %v376
        %v378 = vrot.slane %v162, %v377
        %v379 = vcombine.high %v163, %v163
        %v381 = vunpack.c.l.s4 1983009808
        %v382 = vunpack.c.0.s8 %v381
        %v383 = vlaneseq
        %v384 = vshrl.u32 %v383, 7
        %v385 = vsub.s32 %v382, %v384
        %v386 = vrot.slane %v163, %v385
        %v388 = vunpack.c.l.s4 1983009808
        %v389 = vunpack.c.0.s8 %v388
        %v390 = vlaneseq
        %v391 = vshrl.u32 %v390, 7
        %v392 = vsub.s32 %v389, %v391
        %v393 = vrot.slane %v379, %v392
        %v394 = vcombine.high %v386, %v386
        %v395 = vcombine.high %v393, %v393
        %v397 = vunpack.c.l.s4 1983009808
        %v398 = vunpack.c.0.s8 %v397
        %v399 = vlaneseq
        %v400 = vshrl.u32 %v399, 7
        %v401 = vsub.s32 %v398, %v400
        %v402 = vrot.slane %v164, %v401
        %v403 = vcombine.high %v165, %v165
        %v405 = vunpack.c.l.s4 1983009808
        %v406 = vunpack.c.0.s8 %v405
        %v407 = vlaneseq
        %v408 = vshrl.u32 %v407, 7
        %v409 = vsub.s32 %v406, %v408
        %v410 = vrot.slane %v165, %v409
        %v412 = vunpack.c.l.s4 1983009808
        %v413 = vunpack.c.0.s8 %v412
        %v414 = vlaneseq
        %v415 = vshrl.u32 %v414, 7
        %v416 = vsub.s32 %v413, %v415
        %v417 = vrot.slane %v403, %v416
        %v418 = vcombine.high %v410, %v410
        %v419 = vcombine.high %v417, %v417
        %v421 = vunpack.c.l.s4 1983009808
        %v422 = vunpack.c.0.s8 %v421
        %v423 = vlaneseq
        %v424 = vshrl.u32 %v423, 7
        %v425 = vsub.s32 %v422, %v424
        %v426 = vrot.slane %v166, %v425
        %v477 = vld [vmem:[%s131] sm:$0x1]
        %v478 = vcombine.low %v194, %v202
        %v479 = vcombine.low %v201, %v203
        %v481 = vunpack.c.l.s4 1983009808
        %v482 = vunpack.c.0.s8 %v481
        %v483 = vlaneseq
        %v484 = vshrl.u32 %v483, 7
        %v485 = vsub.s32 %v482, %v484
        %v486 = vrot.slane %v478, %v485
        %v488 = vunpack.c.l.s4 1983009808
        %v489 = vunpack.c.0.s8 %v488
        %v490 = vlaneseq
        %v491 = vshrl.u32 %v490, 7
        %v492 = vsub.s32 %v489, %v491
        %v493 = vrot.slane %v479, %v492
        %v494 = vcombine.low %v486, %v493
        %v495 = vcombine.low %v210, %v218
        %v496 = vcombine.low %v226, %v225
        %v498 = vunpack.c.l.s4 1983009808
        %v499 = vunpack.c.0.s8 %v498
        %v500 = vlaneseq
        %v501 = vshrl.u32 %v500, 7
        %v502 = vsub.s32 %v499, %v501
        %v503 = vrot.slane %v495, %v502
        %v505 = vunpack.c.l.s4 1983009808
        %v506 = vunpack.c.0.s8 %v505
        %v507 = vlaneseq
        %v508 = vshrl.u32 %v507, 7
        %v509 = vsub.s32 %v506, %v508
        %v510 = vrot.slane %v496, %v509
        %v511 = vcombine.low %v503, %v510
        %v512 = vcombine.low %v227, %v234
        %v513 = vcombine.low %v242, %v250
        %v515 = vunpack.c.l.s4 1983009808
        %v516 = vunpack.c.0.s8 %v515
        %v517 = vlaneseq
        %v518 = vshrl.u32 %v517, 7
        %v519 = vsub.s32 %v516, %v518
        %v520 = vrot.slane %v512, %v519
        %v522 = vunpack.c.l.s4 1983009808
        %v523 = vunpack.c.0.s8 %v522
        %v524 = vlaneseq
        %v525 = vshrl.u32 %v524, 7
        %v526 = vsub.s32 %v523, %v525
        %v527 = vrot.slane %v513, %v526
        %v528 = vcombine.low %v520, %v527
        %v529 = vcombine.low %v249, %v251
        %v530 = vcombine.low %v258, %v266
        %v532 = vunpack.c.l.s4 1983009808
        %v533 = vunpack.c.0.s8 %v532
        %v534 = vlaneseq
        %v535 = vshrl.u32 %v534, 7
        %v536 = vsub.s32 %v533, %v535
        %v537 = vrot.slane %v529, %v536
        %v539 = vunpack.c.l.s4 1983009808
        %v540 = vunpack.c.0.s8 %v539
        %v541 = vlaneseq
        %v542 = vshrl.u32 %v541, 7
        %v543 = vsub.s32 %v540, %v542
        %v544 = vrot.slane %v530, %v543
        %v545 = vcombine.low %v537, %v544
        %v546 = vcombine.low %v274, %v273
        %v547 = vcombine.low %v275, %v282
        %v549 = vunpack.c.l.s4 1983009808
        %v550 = vunpack.c.0.s8 %v549
        %v551 = vlaneseq
        %v552 = vshrl.u32 %v551, 7
        %v553 = vsub.s32 %v550, %v552
        %v554 = vrot.slane %v546, %v553
        %v556 = vunpack.c.l.s4 1983009808
        %v557 = vunpack.c.0.s8 %v556
        %v558 = vlaneseq
        %v559 = vshrl.u32 %v558, 7
        %v560 = vsub.s32 %v557, %v559
        %v561 = vrot.slane %v547, %v560
        %v562 = vcombine.low %v554, %v561
        %v563 = vcombine.low %v290, %v298
        %v564 = vcombine.low %v297, %v299
        %v566 = vunpack.c.l.s4 1983009808
        %v567 = vunpack.c.0.s8 %v566
        %v568 = vlaneseq
        %v569 = vshrl.u32 %v568, 7
        %v570 = vsub.s32 %v567, %v569
        %v571 = vrot.slane %v563, %v570
        %v573 = vunpack.c.l.s4 1983009808
        %v574 = vunpack.c.0.s8 %v573
        %v575 = vlaneseq
        %v576 = vshrl.u32 %v575, 7
        %v577 = vsub.s32 %v574, %v576
        %v578 = vrot.slane %v564, %v577
        %v579 = vcombine.low %v571, %v578
        %v580 = vcombine.low %v306, %v314
        %v581 = vcombine.low %v322, %v321
        %v583 = vunpack.c.l.s4 1983009808
        %v584 = vunpack.c.0.s8 %v583
        %v585 = vlaneseq
        %v586 = vshrl.u32 %v585, 7
        %v587 = vsub.s32 %v584, %v586
        %v588 = vrot.slane %v580, %v587
        %v590 = vunpack.c.l.s4 1983009808
        %v591 = vunpack.c.0.s8 %v590
        %v592 = vlaneseq
        %v593 = vshrl.u32 %v592, 7
        %v594 = vsub.s32 %v591, %v593
        %v595 = vrot.slane %v581, %v594
        %v596 = vcombine.low %v588, %v595
        %v597 = vcombine.low %v323, %v330
        %v598 = vcombine.low %v338, %v346
        %v600 = vunpack.c.l.s4 1983009808
        %v601 = vunpack.c.0.s8 %v600
        %v602 = vlaneseq
        %v603 = vshrl.u32 %v602, 7
        %v604 = vsub.s32 %v601, %v603
        %v605 = vrot.slane %v597, %v604
        %v607 = vunpack.c.l.s4 1983009808
        %v608 = vunpack.c.0.s8 %v607
        %v609 = vlaneseq
        %v610 = vshrl.u32 %v609, 7
        %v611 = vsub.s32 %v608, %v610
        %v612 = vrot.slane %v598, %v611
        %v613 = vcombine.low %v605, %v612
        %v614 = vcombine.low %v345, %v347
        %v615 = vcombine.low %v354, %v362
        %v617 = vunpack.c.l.s4 1983009808
        %v618 = vunpack.c.0.s8 %v617
        %v619 = vlaneseq
        %v620 = vshrl.u32 %v619, 7
        %v621 = vsub.s32 %v618, %v620
        %v622 = vrot.slane %v614, %v621
        %v624 = vunpack.c.l.s4 1983009808
        %v625 = vunpack.c.0.s8 %v624
        %v626 = vlaneseq
        %v627 = vshrl.u32 %v626, 7
        %v628 = vsub.s32 %v625, %v627
        %v629 = vrot.slane %v615, %v628
        %v630 = vcombine.low %v622, %v629
        %v631 = vcombine.low %v370, %v369
        %v632 = vcombine.low %v371, %v378
        %v634 = vunpack.c.l.s4 1983009808
        %v635 = vunpack.c.0.s8 %v634
        %v636 = vlaneseq
        %v637 = vshrl.u32 %v636, 7
        %v638 = vsub.s32 %v635, %v637
        %v639 = vrot.slane %v631, %v638
        %v641 = vunpack.c.l.s4 1983009808
        %v642 = vunpack.c.0.s8 %v641
        %v643 = vlaneseq
        %v644 = vshrl.u32 %v643, 7
        %v645 = vsub.s32 %v642, %v644
        %v646 = vrot.slane %v632, %v645
        %v647 = vcombine.low %v639, %v646
        %v648 = vcombine.low %v386, %v394
        %v649 = vcombine.low %v393, %v395
        %v651 = vunpack.c.l.s4 1983009808
        %v652 = vunpack.c.0.s8 %v651
        %v653 = vlaneseq
        %v654 = vshrl.u32 %v653, 7
        %v655 = vsub.s32 %v652, %v654
        %v656 = vrot.slane %v648, %v655
        %v658 = vunpack.c.l.s4 1983009808
        %v659 = vunpack.c.0.s8 %v658
        %v660 = vlaneseq
        %v661 = vshrl.u32 %v660, 7
        %v662 = vsub.s32 %v659, %v661
        %v663 = vrot.slane %v649, %v662
        %v664 = vcombine.low %v656, %v663
        %v665 = vcombine.low %v402, %v410
        %v666 = vcombine.low %v418, %v417
        %v668 = vunpack.c.l.s4 1983009808
        %v669 = vunpack.c.0.s8 %v668
        %v670 = vlaneseq
        %v671 = vshrl.u32 %v670, 7
        %v672 = vsub.s32 %v669, %v671
        %v673 = vrot.slane %v665, %v672
        %v675 = vunpack.c.l.s4 1983009808
        %v676 = vunpack.c.0.s8 %v675
        %v677 = vlaneseq
        %v678 = vshrl.u32 %v677, 7
        %v679 = vsub.s32 %v676, %v678
        %v680 = vrot.slane %v666, %v679
        %v681 = vcombine.low %v673, %v680
        %v682 = vcombine.low %v419, %v426
        %v684 = vunpack.c.l.s4 1983009808
        %v685 = vunpack.c.0.s8 %v684
        %v686 = vlaneseq
        %v687 = vshrl.u32 %v686, 7
        %v688 = vsub.s32 %v685, %v687
        %v689 = vrot.slane %v682, %v688
        %vm703 = vcmask 31744
        %v704 = vsel %vm703, %v494, 0.0
        %v705 = vsel %vm703, %v511, 0.0
        %v706 = vadd.f32 %v704, %v705
        %v707 = vsel %vm703, %v528, 0.0
        %v708 = vadd.f32 %v706, %v707
        %v709 = vsel %vm703, %v545, 0.0
        %v710 = vadd.f32 %v708, %v709
        %v711 = vsel %vm703, %v562, 0.0
        %v712 = vadd.f32 %v710, %v711
        %v713 = vsel %vm703, %v579, 0.0
        %v714 = vadd.f32 %v712, %v713
        %v715 = vsel %vm703, %v596, 0.0
        %v716 = vadd.f32 %v714, %v715
        %v717 = vsel %vm703, %v613, 0.0
        %v718 = vadd.f32 %v716, %v717
        %v719 = vsel %vm703, %v630, 0.0
        %v720 = vadd.f32 %v718, %v719
        %v721 = vsel %vm703, %v647, 0.0
        %v722 = vadd.f32 %v720, %v721
        %v723 = vsel %vm703, %v664, 0.0
        %v724 = vadd.f32 %v722, %v723
        %v725 = vsel %vm703, %v681, 0.0
        %v726 = vadd.f32 %v724, %v725
        %vm727 = vcmask 27648
        %v728 = vsel %vm727, %v689, 0.0
        %v729 = vadd.f32 %v726, %v728
        %v730 = vrot.slane %v729, 4
        %v731 = vadd.f32 %v729, %v730
        %v732 = vrot.slane %v731, 2
        %v733 = vadd.f32 %v731, %v732
        %v734 = vrot.slane %v733, 1
        %v735 = vadd.f32 %v733, %v734
        %v736 = vadd.f32 %v477, %v735
        %vm737 = vcmask 24576
        %738 = vst.msk [vmem:[%s131] sm:$0x1] %vm737, %v736
        %v739 = vld [vmem:[%s131 + $0x1] sm:$0x1]
        %v740 = vmul.f32 %v194, %v194
        %v741 = vmul.f32 %v202, %v202
        %v742 = vmul.f32 %v201, %v201
        %v743 = vmul.f32 %v203, %v203
        %v744 = vmul.f32 %v210, %v210
        %v745 = vmul.f32 %v218, %v218
        %v746 = vmul.f32 %v226, %v226
        %v747 = vmul.f32 %v225, %v225
        %v748 = vmul.f32 %v227, %v227
        %v749 = vmul.f32 %v234, %v234
        %v750 = vmul.f32 %v242, %v242
        %v751 = vmul.f32 %v250, %v250
        %v752 = vmul.f32 %v249, %v249
        %v753 = vmul.f32 %v251, %v251
        %v754 = vmul.f32 %v258, %v258
        %v755 = vmul.f32 %v266, %v266
        %v756 = vmul.f32 %v274, %v274
        %v757 = vmul.f32 %v273, %v273
        %v758 = vmul.f32 %v275, %v275
        %v759 = vmul.f32 %v282, %v282
        %v760 = vmul.f32 %v290, %v290
        %v761 = vmul.f32 %v298, %v298
        %v762 = vmul.f32 %v297, %v297
        %v763 = vmul.f32 %v299, %v299
        %v764 = vmul.f32 %v306, %v306
        %v765 = vmul.f32 %v314, %v314
        %v766 = vmul.f32 %v322, %v322
        %v767 = vmul.f32 %v321, %v321
        %v768 = vmul.f32 %v323, %v323
        %v769 = vmul.f32 %v330, %v330
        %v770 = vmul.f32 %v338, %v338
        %v771 = vmul.f32 %v346, %v346
        %v772 = vmul.f32 %v345, %v345
        %v773 = vmul.f32 %v347, %v347
        %v774 = vmul.f32 %v354, %v354
        %v775 = vmul.f32 %v362, %v362
        %v776 = vmul.f32 %v370, %v370
        %v777 = vmul.f32 %v369, %v369
        %v778 = vmul.f32 %v371, %v371
        %v779 = vmul.f32 %v378, %v378
        %v780 = vmul.f32 %v386, %v386
        %v781 = vmul.f32 %v394, %v394
        %v782 = vmul.f32 %v393, %v393
        %v783 = vmul.f32 %v395, %v395
        %v784 = vmul.f32 %v402, %v402
        %v785 = vmul.f32 %v410, %v410
        %v786 = vmul.f32 %v418, %v418
        %v787 = vmul.f32 %v417, %v417
        %v788 = vmul.f32 %v419, %v419
        %v789 = vmul.f32 %v426, %v426
        %v840 = vcombine.low %v740, %v741
        %v841 = vcombine.low %v742, %v743
        %v843 = vunpack.c.l.s4 1983009808
        %v844 = vunpack.c.0.s8 %v843
        %v845 = vlaneseq
        %v846 = vshrl.u32 %v845, 7
        %v847 = vsub.s32 %v844, %v846
        %v848 = vrot.slane %v840, %v847
        %v850 = vunpack.c.l.s4 1983009808
        %v851 = vunpack.c.0.s8 %v850
        %v852 = vlaneseq
        %v853 = vshrl.u32 %v852, 7
        %v854 = vsub.s32 %v851, %v853
        %v855 = vrot.slane %v841, %v854
        %v856 = vcombine.low %v848, %v855
        %v857 = vcombine.low %v744, %v745
        %v858 = vcombine.low %v746, %v747
        %v860 = vunpack.c.l.s4 1983009808
        %v861 = vunpack.c.0.s8 %v860
        %v862 = vlaneseq
        %v863 = vshrl.u32 %v862, 7
        %v864 = vsub.s32 %v861, %v863
        %v865 = vrot.slane %v857, %v864
        %v867 = vunpack.c.l.s4 1983009808
        %v868 = vunpack.c.0.s8 %v867
        %v869 = vlaneseq
        %v870 = vshrl.u32 %v869, 7
        %v871 = vsub.s32 %v868, %v870
        %v872 = vrot.slane %v858, %v871
        %v873 = vcombine.low %v865, %v872
        %v874 = vcombine.low %v748, %v749
        %v875 = vcombine.low %v750, %v751
        %v877 = vunpack.c.l.s4 1983009808
        %v878 = vunpack.c.0.s8 %v877
        %v879 = vlaneseq
        %v880 = vshrl.u32 %v879, 7
        %v881 = vsub.s32 %v878, %v880
        %v882 = vrot.slane %v874, %v881
        %v884 = vunpack.c.l.s4 1983009808
        %v885 = vunpack.c.0.s8 %v884
        %v886 = vlaneseq
        %v887 = vshrl.u32 %v886, 7
        %v888 = vsub.s32 %v885, %v887
        %v889 = vrot.slane %v875, %v888
        %v890 = vcombine.low %v882, %v889
        %v891 = vcombine.low %v752, %v753
        %v892 = vcombine.low %v754, %v755
        %v894 = vunpack.c.l.s4 1983009808
        %v895 = vunpack.c.0.s8 %v894
        %v896 = vlaneseq
        %v897 = vshrl.u32 %v896, 7
        %v898 = vsub.s32 %v895, %v897
        %v899 = vrot.slane %v891, %v898
        %v901 = vunpack.c.l.s4 1983009808
        %v902 = vunpack.c.0.s8 %v901
        %v903 = vlaneseq
        %v904 = vshrl.u32 %v903, 7
        %v905 = vsub.s32 %v902, %v904
        %v906 = vrot.slane %v892, %v905
        %v907 = vcombine.low %v899, %v906
        %v908 = vcombine.low %v756, %v757
        %v909 = vcombine.low %v758, %v759
        %v911 = vunpack.c.l.s4 1983009808
        %v912 = vunpack.c.0.s8 %v911
        %v913 = vlaneseq
        %v914 = vshrl.u32 %v913, 7
        %v915 = vsub.s32 %v912, %v914
        %v916 = vrot.slane %v908, %v915
        %v918 = vunpack.c.l.s4 1983009808
        %v919 = vunpack.c.0.s8 %v918
        %v920 = vlaneseq
        %v921 = vshrl.u32 %v920, 7
        %v922 = vsub.s32 %v919, %v921
        %v923 = vrot.slane %v909, %v922
        %v924 = vcombine.low %v916, %v923
        %v925 = vcombine.low %v760, %v761
        %v926 = vcombine.low %v762, %v763
        %v928 = vunpack.c.l.s4 1983009808
        %v929 = vunpack.c.0.s8 %v928
        %v930 = vlaneseq
        %v931 = vshrl.u32 %v930, 7
        %v932 = vsub.s32 %v929, %v931
        %v933 = vrot.slane %v925, %v932
        %v935 = vunpack.c.l.s4 1983009808
        %v936 = vunpack.c.0.s8 %v935
        %v937 = vlaneseq
        %v938 = vshrl.u32 %v937, 7
        %v939 = vsub.s32 %v936, %v938
        %v940 = vrot.slane %v926, %v939
        %v941 = vcombine.low %v933, %v940
        %v942 = vcombine.low %v764, %v765
        %v943 = vcombine.low %v766, %v767
        %v945 = vunpack.c.l.s4 1983009808
        %v946 = vunpack.c.0.s8 %v945
        %v947 = vlaneseq
        %v948 = vshrl.u32 %v947, 7
        %v949 = vsub.s32 %v946, %v948
        %v950 = vrot.slane %v942, %v949
        %v952 = vunpack.c.l.s4 1983009808
        %v953 = vunpack.c.0.s8 %v952
        %v954 = vlaneseq
        %v955 = vshrl.u32 %v954, 7
        %v956 = vsub.s32 %v953, %v955
        %v957 = vrot.slane %v943, %v956
        %v958 = vcombine.low %v950, %v957
        %v959 = vcombine.low %v768, %v769
        %v960 = vcombine.low %v770, %v771
        %v962 = vunpack.c.l.s4 1983009808
        %v963 = vunpack.c.0.s8 %v962
        %v964 = vlaneseq
        %v965 = vshrl.u32 %v964, 7
        %v966 = vsub.s32 %v963, %v965
        %v967 = vrot.slane %v959, %v966
        %v969 = vunpack.c.l.s4 1983009808
        %v970 = vunpack.c.0.s8 %v969
        %v971 = vlaneseq
        %v972 = vshrl.u32 %v971, 7
        %v973 = vsub.s32 %v970, %v972
        %v974 = vrot.slane %v960, %v973
        %v975 = vcombine.low %v967, %v974
        %v976 = vcombine.low %v772, %v773
        %v977 = vcombine.low %v774, %v775
        %v979 = vunpack.c.l.s4 1983009808
        %v980 = vunpack.c.0.s8 %v979
        %v981 = vlaneseq
        %v982 = vshrl.u32 %v981, 7
        %v983 = vsub.s32 %v980, %v982
        %v984 = vrot.slane %v976, %v983
        %v986 = vunpack.c.l.s4 1983009808
        %v987 = vunpack.c.0.s8 %v986
        %v988 = vlaneseq
        %v989 = vshrl.u32 %v988, 7
        %v990 = vsub.s32 %v987, %v989
        %v991 = vrot.slane %v977, %v990
        %v992 = vcombine.low %v984, %v991
        %v993 = vcombine.low %v776, %v777
        %v994 = vcombine.low %v778, %v779
        %v996 = vunpack.c.l.s4 1983009808
        %v997 = vunpack.c.0.s8 %v996
        %v998 = vlaneseq
        %v999 = vshrl.u32 %v998, 7
        %v1000 = vsub.s32 %v997, %v999
        %v1001 = vrot.slane %v993, %v1000
        %v1003 = vunpack.c.l.s4 1983009808
        %v1004 = vunpack.c.0.s8 %v1003
        %v1005 = vlaneseq
        %v1006 = vshrl.u32 %v1005, 7
        %v1007 = vsub.s32 %v1004, %v1006
        %v1008 = vrot.slane %v994, %v1007
        %v1009 = vcombine.low %v1001, %v1008
        %v1010 = vcombine.low %v780, %v781
        %v1011 = vcombine.low %v782, %v783
        %v1013 = vunpack.c.l.s4 1983009808
        %v1014 = vunpack.c.0.s8 %v1013
        %v1015 = vlaneseq
        %v1016 = vshrl.u32 %v1015, 7
        %v1017 = vsub.s32 %v1014, %v1016
        %v1018 = vrot.slane %v1010, %v1017
        %v1020 = vunpack.c.l.s4 1983009808
        %v1021 = vunpack.c.0.s8 %v1020
        %v1022 = vlaneseq
        %v1023 = vshrl.u32 %v1022, 7
        %v1024 = vsub.s32 %v1021, %v1023
        %v1025 = vrot.slane %v1011, %v1024
        %v1026 = vcombine.low %v1018, %v1025
        %v1027 = vcombine.low %v784, %v785
        %v1028 = vcombine.low %v786, %v787
        %v1030 = vunpack.c.l.s4 1983009808
        %v1031 = vunpack.c.0.s8 %v1030
        %v1032 = vlaneseq
        %v1033 = vshrl.u32 %v1032, 7
        %v1034 = vsub.s32 %v1031, %v1033
        %v1035 = vrot.slane %v1027, %v1034
        %v1037 = vunpack.c.l.s4 1983009808
        %v1038 = vunpack.c.0.s8 %v1037
        %v1039 = vlaneseq
        %v1040 = vshrl.u32 %v1039, 7
        %v1041 = vsub.s32 %v1038, %v1040
        %v1042 = vrot.slane %v1028, %v1041
        %v1043 = vcombine.low %v1035, %v1042
        %v1044 = vcombine.low %v788, %v789
        %v1046 = vunpack.c.l.s4 1983009808
        %v1047 = vunpack.c.0.s8 %v1046
        %v1048 = vlaneseq
        %v1049 = vshrl.u32 %v1048, 7
        %v1050 = vsub.s32 %v1047, %v1049
        %v1051 = vrot.slane %v1044, %v1050
        %v1065 = vsel %vm703, %v856, 0.0
        %v1066 = vsel %vm703, %v873, 0.0
        %v1067 = vadd.f32 %v1065, %v1066
        %v1068 = vsel %vm703, %v890, 0.0
        %v1069 = vadd.f32 %v1067, %v1068
        %v1070 = vsel %vm703, %v907, 0.0
        %v1071 = vadd.f32 %v1069, %v1070
        %v1072 = vsel %vm703, %v924, 0.0
        %v1073 = vadd.f32 %v1071, %v1072
        %v1074 = vsel %vm703, %v941, 0.0
        %v1075 = vadd.f32 %v1073, %v1074
        %v1076 = vsel %vm703, %v958, 0.0
        %v1077 = vadd.f32 %v1075, %v1076
        %v1078 = vsel %vm703, %v975, 0.0
        %v1079 = vadd.f32 %v1077, %v1078
        %v1080 = vsel %vm703, %v992, 0.0
        %v1081 = vadd.f32 %v1079, %v1080
        %v1082 = vsel %vm703, %v1009, 0.0
        %v1083 = vadd.f32 %v1081, %v1082
        %v1084 = vsel %vm703, %v1026, 0.0
        %v1085 = vadd.f32 %v1083, %v1084
        %v1086 = vsel %vm703, %v1043, 0.0
        %v1087 = vadd.f32 %v1085, %v1086
        %v1088 = vsel %vm727, %v1051, 0.0
        %v1089 = vadd.f32 %v1087, %v1088
        %v1090 = vrot.slane %v1089, 4
        %v1091 = vadd.f32 %v1089, %v1090
        %v1092 = vrot.slane %v1091, 2
        %v1093 = vadd.f32 %v1091, %v1092
        %v1094 = vrot.slane %v1093, 1
        %v1095 = vadd.f32 %v1093, %v1094
        %v1096 = vadd.f32 %v739, %v1095
        %1097 = vst.msk [vmem:[%s131 + $0x1] sm:$0x1] %vm737, %v1096
        %s1098 = sand.u32 %s63, 1
        %s1099 = scalar_lea.sflag [#allocation3], %s1098
        %s1100 = sand.u32 %s63, 1
        %s1101 = smul.addr %s1100, 2
        %s1102 = scalar_lea.vmem [#allocation2], %s1101
        // Predicated region
        $region29: #{tpu_custom_call.1} parent=23 // pred_check
          %p1103 = pneg %p73
        $region30: #{tpu_custom_call.1} parent=23 // pred_check_branch
          %1105 = sbr.rel (%p1103) target = $region32
        $region31: #{tpu_custom_call.1} parent=23 // pred_region
          %s1107 = ssub.s32 32, 32
          %1108 = vsyncadd %s1099, %s1107
          %s1109 = smul.addr %s19, 32
          %s1110 = scalar_lea.hbm %s1, %s1109
          %s1112 = sshll.u32 %s1102, 4
          %s1113 = int_to_ptr.vmem [resolvable:$true] %s1112
          %1115 = dma.vmem_to_hbm [thread:$0]  %s1113, 32, %s1110, %s1099
        $region32: #{tpu_custom_call.1} parent=23 // pred_fallthru
          _
      $region24: #{tpu_custom_call.1} parent=5 // pred_fallthru
        _
      %p1116 = scmp.le.s32.totalorder 2, %s10
      // Predicated region
      $region33: #{tpu_custom_call.1} parent=5 // pred_check
        %p1117 = pneg %p1116
      $region34: #{tpu_custom_call.1} parent=5 // pred_check_branch
        %1119 = sbr.rel (%p1117) target = $region36
      $region35: #{tpu_custom_call.1} parent=5 // pred_region
        %s1120 = ssub.s32 %s10, 2
        // Predicated region
        $region37: #{tpu_custom_call.1} parent=35 // pred_check
          %p1121 = pneg %p79
        $region38: #{tpu_custom_call.1} parent=35 // pred_check_branch
          %1123 = sbr.rel (%p1121) target = $region40
        $region39: #{tpu_custom_call.1} parent=35 // pred_region
          %s1124 = sand.u32 %s64, 1
          %s1125 = scalar_lea.sflag [#allocation3], %s1124
          %s1126 = sand.u32 %s64, 1
          %s1127 = smul.addr %s1126, 2
          %s1128 = scalar_lea.vmem [#allocation2], %s1127
          %1129 = dma.done %s1125, 32
        $region40: #{tpu_custom_call.1} parent=35 // pred_fallthru
          _
      $region36: #{tpu_custom_call.1} parent=5 // pred_fallthru
        _
    $region6: #{tpu_custom_call.1} parent=1 // loop_footer
      %s14 = sadd.s32 1, %s10
    $region7: #{tpu_custom_call.1} parent=1 // loop_footer_branch
      %9 = sbr.rel target = $region3
    $region8: #{tpu_custom_call.1} parent=1 // loop_exit
      _
    %1130 = vsyncpa [#allocation3], 1
    %s1131 = scalar_lea.sflag [#allocation3], 1
    %1132 = vsyncpa %s1131, 1

</llo_original>
